<compile_context>
chip_gen: v5e
topology: v5e:2x2
jax: 0.10.0
libtpu: 0.0.40
codegen_flags: <defaults>
</compile_context>

<pallas_src>
import functools

import jax
import jax.numpy as jnp
from jax.experimental import pallas as pl
from jax.experimental.pallas import tpu as pltpu


def _round_up(x, m):
    return (x + m - 1) // m * m


def _convnet_kernel(*refs, motif_len, l_out, max_pool, hidden_layer,
                    training_mode, dropout_value):
    # Static (trace-time) config decides the argument list.
    if hidden_layer:
        (x_ref, wb_ref, cb_ref, hwT_ref, hb_ref, nwT_ref, nb_ref, out_ref) = refs
    else:
        (x_ref, wb_ref, cb_ref, nwT_ref, nb_ref, out_ref) = refs
        hwT_ref = hb_ref = None

    xb = x_ref[...]                                   # (B, C, L) raw sample block

    # --- in-kernel im2col: patches[b, t*C + c, j] = x[b, c, j + t] ---
    # motif_len static lane-shifted slices concatenated on the K (sublane) axis;
    # lives only in VMEM, so HBM traffic is just the raw x block.
    patches = jnp.concatenate(
        [xb[:, :, t:t + l_out] for t in range(motif_len)], axis=1)   # (B, K, L_out)

    # --- conv1d as ONE batched contraction (depth K = C*motif_len) ---
    # wb_ref is the flattened conv weight pre-broadcast over the batch in the
    # wrapper (constant index_map -> DMA'd once, VMEM resident); no per-step
    # broadcast copies here.
    conv = jnp.einsum('bmk,bkl->bml', wb_ref[...], patches,
                      preferred_element_type=jnp.float32)            # (B, M, L_out)

    # bias + ReLU fused in one elementwise pass; no padded positions exist, so
    # no iota / where mask is needed.
    rect = jnp.maximum(conv + cb_ref[...], 0.0)

    # --- pooling: last-axis (lane) reduces over the true L_out ---
    pool_max = jnp.max(rect, axis=-1)                 # (B, M)
    if max_pool:
        pool = pool_max
    else:
        # TODO(synk): max and sum are two separate XLU sweeps over rect; there is
        # no clean jnp expression for a single fused sweep.
        pool_avg = jnp.sum(rect, axis=-1) * (1.0 / l_out)
        pool = jnp.concatenate([pool_max, pool_avg], axis=-1)        # (B, 2M)

    # --- dense head, batched; batch ends on the lane axis of every result ---
    if hidden_layer:
        hid = jnp.einsum('hp,bp->hb', hwT_ref[...], pool,
                         preferred_element_type=jnp.float32) + hb_ref[...]   # (32, B)
        hid = jnp.maximum(hid, 0.0)
        out = dropout_value * jnp.dot(nwT_ref[...], hid,
                                      preferred_element_type=jnp.float32) + nb_ref[...]
    else:
        o = jnp.einsum('op,bp->ob', nwT_ref[...], pool,
                       preferred_element_type=jnp.float32)                   # (1, B)
        out = (o if training_mode else dropout_value * o) + nb_ref[...]

    out_ref[0] = out.astype(out_ref.dtype)            # lane-dense (1, B) row


def _pick_batch_block(n, c, l, k, m):
    """Samples per grid step: fit a conservative VMEM budget (safe for v5e's
    16 MiB scoped default and v7x's 64 MiB VMEM) and produce >= 2 grid blocks
    whenever N > 16 so the "parallel" batch axis can shard over both v7x
    TensorCores, while balancing blocks to limit padded-row waste."""
    lanes = _round_up(l, 128)

    def est_bytes(b):
        x_blk = b * _round_up(c, 8) * lanes * 4 * 2          # input, double buffered
        patches = b * _round_up(k, 8) * lanes * 4            # in-VMEM im2col
        w_bcast = b * _round_up(m, 8) * _round_up(k, 128) * 4 * 2
        rect = b * _round_up(m, 8) * lanes * 4 * 2           # conv + rect intermediates
        return x_blk + patches + w_bcast + rect

    budget = 12 * 1024 * 1024
    b_cap = 128
    while b_cap > 8 and est_bytes(b_cap) > budget:
        b_cap //= 2

    if n <= 16:
        b = min(b_cap, _round_up(n, 8))
    else:
        n_blocks = max(pl.cdiv(n, b_cap), 2)                 # >=2: use both v7x cores
        b = min(b_cap, _round_up(pl.cdiv(n, n_blocks), 8))
    b = max(b, 8)
    n_pad = _round_up(n, b)
    return b, n_pad, n_pad // b


def convnet_forward(x, params, *, max_pool, hidden_layer, training_mode,
                    dropout_value, block_b=None):
    N, C, L = x.shape
    conv_w = params["conv_w"]                   # (M, 4, motif_len)
    M, _, motif_len = conv_w.shape
    L_out = L - motif_len + 1
    assert L_out > 0, "sequence shorter than motif"
    K = C * motif_len

    if block_b is None:
        B, N_pad, num_blocks = _pick_batch_block(N, C, L, K, M)
    else:
        B = max(8, _round_up(min(block_b, _round_up(N, 8)), 8))
        N_pad = _round_up(N, B)
        num_blocks = N_pad // B

    x_pad = jnp.pad(x.astype(jnp.float32), ((0, N_pad - N), (0, 0), (0, 0)))

    # Flattened conv weight with k = t*C + c (matches the in-kernel patch order),
    # broadcast over the block's batch once here; resident in VMEM in the kernel.
    w_flat = jnp.transpose(conv_w, (0, 2, 1)).reshape(M, K).astype(jnp.float32)
    w_bcast = jnp.broadcast_to(w_flat[None], (B, M, K))
    conv_b = params["conv_b"].reshape(M, 1).astype(jnp.float32)  # rectification weights
    neural_wT = params["neural_w"].T.astype(jnp.float32)         # (1, 32) or (1, P)
    neural_b = params["neural_b"].reshape(1, 1).astype(jnp.float32)

    inputs = [x_pad, w_bcast, conv_b]
    in_specs = [
        pl.BlockSpec((B, C, L), lambda i: (i, 0, 0)),
        pl.BlockSpec((B, M, K), lambda i: (0, 0, 0)),
        pl.BlockSpec((M, 1), lambda i: (0, 0)),
    ]
    if hidden_layer:
        hidden_wT = params["hidden_w"].T.astype(jnp.float32)     # (32, P)
        hidden_b = params["hidden_b"].reshape(-1, 1).astype(jnp.float32)
        inputs += [hidden_wT, hidden_b]
        in_specs += [
            pl.BlockSpec(hidden_wT.shape, lambda i: (0, 0)),
            pl.BlockSpec(hidden_b.shape, lambda i: (0, 0)),
        ]
    inputs += [neural_wT, neural_b]
    in_specs += [
        pl.BlockSpec(neural_wT.shape, lambda i: (0, 0)),
        pl.BlockSpec(neural_b.shape, lambda i: (0, 0)),
    ]

    kernel = functools.partial(
        _convnet_kernel, motif_len=motif_len, l_out=L_out, max_pool=max_pool,
        hidden_layer=hidden_layer, training_mode=training_mode,
        dropout_value=dropout_value)

    out = pl.pallas_call(
        kernel,
        out_shape=jax.ShapeDtypeStruct((num_blocks, 1, B), jnp.float32),
        grid=(num_blocks,),
        in_specs=in_specs,
        # Each grid step owns its own lane-dense output block -> batch axis is
        # "parallel" (both TensorCores get used on v7x when num_blocks >= 2).
        out_specs=pl.BlockSpec((1, 1, B), lambda i: (i, 0, 0)),
        compiler_params=pltpu.CompilerParams(
            dimension_semantics=("parallel",),
            vmem_limit_bytes=32 * 1024 * 1024),
    )(*inputs)

    return out.reshape(N_pad)[:N].reshape(N, 1)


def convnet_reference(x, params, *, max_pool, hidden_layer, training_mode,
                      dropout_value):
    """Pure-JAX reference mirroring ConvNet.forward_pass."""
    conv_w = params["conv_w"]
    M, _, motif_len = conv_w.shape
    L = x.shape[2]
    L_out = L - motif_len + 1
    conv = jnp.zeros((x.shape[0], M, L_out), jnp.float32)
    for t in range(motif_len):
        conv = conv + jnp.einsum("mc,ncj->nmj", conv_w[:, :, t],
                                 x[:, :, t:t + L_out])
    conv = conv + params["conv_b"][None, :, None]
    rect = jnp.maximum(conv, 0.0)
    pool = jnp.max(rect, axis=2)
    if not max_pool:
        pool = jnp.concatenate([pool, jnp.mean(rect, axis=2)], axis=1)
    if not hidden_layer:
        o = pool @ params["neural_w"]
        out = (o if training_mode else dropout_value * o) + params["neural_b"]
    else:
        hid = jnp.maximum(pool @ params["hidden_w"] + params["hidden_b"], 0.0)
        out = dropout_value * (hid @ params["neural_w"]) + params["neural_b"]
    return out


if __name__ == "__main__":
    # Module hyper-parameters (small, synthetic).
    num_motifs = 16
    motif_len = 8
    dropout_value = 0.75
    initial_weight = 0.1
    neural_weight = 0.1

    N, C, L = 2, 4, 64

    key = jax.random.PRNGKey(0)
    k_x, k_p1, k_p2 = jax.random.split(key, 3)
    x = jax.random.normal(k_x, (N, C, L), jnp.float32)

    def make_params(k, max_pool, hidden_layer):
        P = num_motifs if max_pool else 2 * num_motifs
        k_cw, k_cb, k_hw, k_hb, k_nw, k_nb = jax.random.split(k, 6)
        params = {
            "conv_w": initial_weight * jax.random.normal(
                k_cw, (num_motifs, 4, motif_len), jnp.float32),
            # rectification_weights = -Normal(0, 1)
            "conv_b": -jax.random.normal(k_cb, (num_motifs,), jnp.float32),
            "neural_b": neural_weight * jax.random.normal(k_nb, (1,), jnp.float32),
        }
        if hidden_layer:
            params["hidden_w"] = 0.3 * jax.random.normal(k_hw, (P, 32), jnp.float32)
            params["hidden_b"] = 0.3 * jax.random.normal(k_hb, (32,), jnp.float32)
            params["neural_w"] = neural_weight * jax.random.normal(
                k_nw, (32, 1), jnp.float32)
        else:
            params["neural_w"] = neural_weight * jax.random.normal(
                k_nw, (P, 1), jnp.float32)
        return params

    configs = [
        dict(max_pool=False, hidden_layer=True, training_mode=False),
        dict(max_pool=True, hidden_layer=False, training_mode=True),
    ]
    for cfg, kp in zip(configs, (k_p1, k_p2)):
        params = make_params(kp, cfg["max_pool"], cfg["hidden_layer"])
        out = convnet_forward(x, params, dropout_value=dropout_value, **cfg)
        out = jax.block_until_ready(out)
        ref = convnet_reference(x, params, dropout_value=dropout_value, **cfg)
        assert out.shape == (N, 1)
        assert jnp.allclose(out, ref, rtol=1e-2, atol=1e-2), (cfg, out, ref)

    # TODO(synk): dropout is the module's deterministic scaling (no stochastic
    # mask), exactly as in ConvNet.forward_pass.
    print("KERNEL_OK")
</pallas_src>

<mosaic_0001>
module attributes {stable_mosaic.version = 11 : i64} {
  func.func @_convnet_kernel(%arg0: i32, %arg1: memref<8x4x64xf32, #tpu.memory_space<vmem>>, %arg2: memref<8x16x32xf32, #tpu.memory_space<vmem>>, %arg3: memref<16x1xf32, #tpu.memory_space<vmem>>, %arg4: memref<32x32xf32, #tpu.memory_space<vmem>>, %arg5: memref<32x1xf32, #tpu.memory_space<vmem>>, %arg6: memref<1x32xf32, #tpu.memory_space<vmem>>, %arg7: memref<1x1xf32, #tpu.memory_space<vmem>>, %arg8: memref<1x1x8xf32, #tpu.memory_space<vmem>>) attributes {dimension_semantics = [#tpu.dimension_semantics<parallel>], iteration_bounds = array<i64: 1>, scalar_prefetch = 0 : i64, scratch_operands = 0 : i64, tpu.core_type = #tpu.core_type<tc>, window_params = [{transform_indices = @transform_0, window_bounds = array<i64: 8, 4, 64>}, {pipeline_mode = #tpu.pipeline_mode<synchronous>, transform_indices = @transform_1, window_bounds = array<i64: 8, 16, 32>}, {pipeline_mode = #tpu.pipeline_mode<synchronous>, transform_indices = @transform_2, window_bounds = array<i64: 16, 1>}, {pipeline_mode = #tpu.pipeline_mode<synchronous>, transform_indices = @transform_3, window_bounds = array<i64: 32, 32>}, {pipeline_mode = #tpu.pipeline_mode<synchronous>, transform_indices = @transform_4, window_bounds = array<i64: 32, 1>}, {pipeline_mode = #tpu.pipeline_mode<synchronous>, transform_indices = @transform_5, window_bounds = array<i64: 1, 32>}, {pipeline_mode = #tpu.pipeline_mode<synchronous>, transform_indices = @transform_6, window_bounds = array<i64: 1, 1>}, {transform_indices = @transform_7, window_bounds = array<i64: 1, 1, 8>}]} {
    %c0 = arith.constant 0 : index
    %c0_0 = arith.constant 0 : index
    %c0_1 = arith.constant 0 : index
    %0 = vector.load %arg1[%c0, %c0_0, %c0_1] : memref<8x4x64xf32, #tpu.memory_space<vmem>>, vector<8x4x64xf32>
    %1 = vector.extract_strided_slice %0 {offsets = [0, 0, 0], sizes = [8, 4, 57], strides = [1, 1, 1]} : vector<8x4x64xf32> to vector<8x4x57xf32>
    %2 = vector.extract_strided_slice %0 {offsets = [0, 0, 1], sizes = [8, 4, 57], strides = [1, 1, 1]} : vector<8x4x64xf32> to vector<8x4x57xf32>
    %3 = vector.extract_strided_slice %0 {offsets = [0, 0, 2], sizes = [8, 4, 57], strides = [1, 1, 1]} : vector<8x4x64xf32> to vector<8x4x57xf32>
    %4 = vector.extract_strided_slice %0 {offsets = [0, 0, 3], sizes = [8, 4, 57], strides = [1, 1, 1]} : vector<8x4x64xf32> to vector<8x4x57xf32>
    %5 = vector.extract_strided_slice %0 {offsets = [0, 0, 4], sizes = [8, 4, 57], strides = [1, 1, 1]} : vector<8x4x64xf32> to vector<8x4x57xf32>
    %6 = vector.extract_strided_slice %0 {offsets = [0, 0, 5], sizes = [8, 4, 57], strides = [1, 1, 1]} : vector<8x4x64xf32> to vector<8x4x57xf32>
    %7 = vector.extract_strided_slice %0 {offsets = [0, 0, 6], sizes = [8, 4, 57], strides = [1, 1, 1]} : vector<8x4x64xf32> to vector<8x4x57xf32>
    %8 = vector.extract_strided_slice %0 {offsets = [0, 0, 7], sizes = [8, 4, 57], strides = [1, 1, 1]} : vector<8x4x64xf32> to vector<8x4x57xf32>
    %9 = tpu.concatenate %1, %2, %3, %4, %5, %6, %7, %8 in 1 : vector<8x4x57xf32>, vector<8x4x57xf32>, vector<8x4x57xf32>, vector<8x4x57xf32>, vector<8x4x57xf32>, vector<8x4x57xf32>, vector<8x4x57xf32>, vector<8x4x57xf32> -> vector<8x32x57xf32>
    %c0_2 = arith.constant 0 : index
    %c0_3 = arith.constant 0 : index
    %c0_4 = arith.constant 0 : index
    %10 = vector.load %arg2[%c0_2, %c0_3, %c0_4] : memref<8x16x32xf32, #tpu.memory_space<vmem>>, vector<8x16x32xf32>
    "tpu.trace_start"() <{level = 10 : i32, message = "bmk,bkl->bml"}> : () -> ()
    %cst = arith.constant dense<0.000000e+00> : vector<8x16x57xf32>
    %11 = tpu.matmul %10, %9, %cst {dimension_numbers = #tpu.dot_dimension_numbers<[2], [1], [1], [2], [0, 0, 0, 1, 1, 2], [0], [0]>} : vector<8x16x32xf32>, vector<8x32x57xf32>, vector<8x16x57xf32> -> vector<8x16x57xf32>
    "tpu.trace_stop"() : () -> ()
    %c0_5 = arith.constant 0 : index
    %c0_6 = arith.constant 0 : index
    %12 = vector.load %arg3[%c0_5, %c0_6] : memref<16x1xf32, #tpu.memory_space<vmem>>, vector<16x1xf32>
    %13 = vector.shape_cast %12 : vector<16x1xf32> to vector<1x16x1xf32>
    %14 = vector.broadcast %13 : vector<1x16x1xf32> to vector<8x16x57xf32>
    %15 = arith.addf %11, %14 : vector<8x16x57xf32>
    %cst_7 = arith.constant 0.000000e+00 : f32
    %16 = vector.broadcast %cst_7 : f32 to vector<8x16x57xf32>
    %17 = arith.maximumf %15, %16 : vector<8x16x57xf32>
    %cst_8 = arith.constant dense<0xFF800000> : vector<8x16xf32>
    %18 = vector.multi_reduction <maximumf>, %17, %cst_8 [2] : vector<8x16x57xf32> to vector<8x16xf32>
    %cst_9 = arith.constant dense<0.000000e+00> : vector<8x16xf32>
    %19 = vector.multi_reduction <add>, %17, %cst_9 [2] : vector<8x16x57xf32> to vector<8x16xf32>
    %cst_10 = arith.constant 0.0175438598 : f32
    %20 = vector.broadcast %cst_10 : f32 to vector<8x16xf32>
    %21 = arith.mulf %19, %20 : vector<8x16xf32>
    %22 = tpu.concatenate %18, %21 in 1 : vector<8x16xf32>, vector<8x16xf32> -> vector<8x32xf32>
    %c0_11 = arith.constant 0 : index
    %c0_12 = arith.constant 0 : index
    %23 = vector.load %arg4[%c0_11, %c0_12] : memref<32x32xf32, #tpu.memory_space<vmem>>, vector<32x32xf32>
    "tpu.trace_start"() <{level = 10 : i32, message = "hp,bp->hb"}> : () -> ()
    %cst_13 = arith.constant dense<0.000000e+00> : vector<32x8xf32>
    %24 = tpu.matmul %23, %22, %cst_13 {dimension_numbers = #tpu.dot_dimension_numbers<[1], [1], [0], [0], [0, 0, 1, 0], [], []>} : vector<32x32xf32>, vector<8x32xf32>, vector<32x8xf32> -> vector<32x8xf32>
    "tpu.trace_stop"() : () -> ()
    %c0_14 = arith.constant 0 : index
    %c0_15 = arith.constant 0 : index
    %25 = vector.load %arg5[%c0_14, %c0_15] : memref<32x1xf32, #tpu.memory_space<vmem>>, vector<32x1xf32>
    %26 = vector.broadcast %25 : vector<32x1xf32> to vector<32x8xf32>
    %27 = arith.addf %24, %26 : vector<32x8xf32>
    %cst_16 = arith.constant 0.000000e+00 : f32
    %28 = vector.broadcast %cst_16 : f32 to vector<32x8xf32>
    %29 = arith.maximumf %27, %28 : vector<32x8xf32>
    %c0_17 = arith.constant 0 : index
    %c0_18 = arith.constant 0 : index
    %30 = vector.load %arg6[%c0_17, %c0_18] : memref<1x32xf32, #tpu.memory_space<vmem>>, vector<1x32xf32>
    %cst_19 = arith.constant dense<0.000000e+00> : vector<1x8xf32>
    %31 = tpu.matmul %30, %29, %cst_19 {dimension_numbers = #tpu.dot_dimension_numbers<[1], [0], [0], [1], [0, 0, 1, 1], [], []>} : vector<1x32xf32>, vector<32x8xf32>, vector<1x8xf32> -> vector<1x8xf32>
    %cst_20 = arith.constant 7.500000e-01 : f32
    %32 = vector.broadcast %cst_20 : f32 to vector<1x8xf32>
    %33 = arith.mulf %32, %31 : vector<1x8xf32>
    %c0_21 = arith.constant 0 : index
    %c0_22 = arith.constant 0 : index
    %34 = vector.load %arg7[%c0_21, %c0_22] : memref<1x1xf32, #tpu.memory_space<vmem>>, vector<1x1xf32>
    %35 = vector.broadcast %34 : vector<1x1xf32> to vector<1x8xf32>
    %36 = arith.addf %33, %35 : vector<1x8xf32>
    %c0_23 = arith.constant 0 : index
    %c0_24 = arith.constant 0 : index
    %c0_25 = arith.constant 0 : index
    %37 = vector.load %arg8[%c0_23, %c0_24, %c0_25] : memref<1x1x8xf32, #tpu.memory_space<vmem>>, vector<1x1x8xf32>
    %38 = vector.shape_cast %37 : vector<1x1x8xf32> to vector<1x8xf32>
    %39 = vector.shape_cast %36 : vector<1x8xf32> to vector<1x1x8xf32>
    tpu.vector_store %arg8[%c0_23, %c0_24, %c0_25], %39 {strides = array<i32>} : memref<1x1x8xf32, #tpu.memory_space<vmem>>, vector<1x1x8xf32>,
    return
  }
  func.func @transform_0(%arg0: i32) -> (i32, i32, i32) {
    %c0_i32 = arith.constant 0 : i32
    %c0_i32_0 = arith.constant 0 : i32
    %c0_i32_1 = arith.constant 0 : i32
    return %arg0, %c0_i32, %c0_i32_0 : i32, i32, i32
  }
  func.func @transform_1(%arg0: i32) -> (i32, i32, i32) {
    %c0_i32 = arith.constant 0 : i32
    %c0_i32_0 = arith.constant 0 : i32
    %c0_i32_1 = arith.constant 0 : i32
    %c0_i32_2 = arith.constant 0 : i32
    return %c0_i32, %c0_i32_0, %c0_i32_1 : i32, i32, i32
  }
  func.func @transform_2(%arg0: i32) -> (i32, i32) {
    %c0_i32 = arith.constant 0 : i32
    %c0_i32_0 = arith.constant 0 : i32
    %c0_i32_1 = arith.constant 0 : i32
    return %c0_i32, %c0_i32_0 : i32, i32
  }
  func.func @transform_3(%arg0: i32) -> (i32, i32) {
    %c0_i32 = arith.constant 0 : i32
    %c0_i32_0 = arith.constant 0 : i32
    %c0_i32_1 = arith.constant 0 : i32
    return %c0_i32, %c0_i32_0 : i32, i32
  }
  func.func @transform_4(%arg0: i32) -> (i32, i32) {
    %c0_i32 = arith.constant 0 : i32
    %c0_i32_0 = arith.constant 0 : i32
    %c0_i32_1 = arith.constant 0 : i32
    return %c0_i32, %c0_i32_0 : i32, i32
  }
  func.func @transform_5(%arg0: i32) -> (i32, i32) {
    %c0_i32 = arith.constant 0 : i32
    %c0_i32_0 = arith.constant 0 : i32
    %c0_i32_1 = arith.constant 0 : i32
    return %c0_i32, %c0_i32_0 : i32, i32
  }
  func.func @transform_6(%arg0: i32) -> (i32, i32) {
    %c0_i32 = arith.constant 0 : i32
    %c0_i32_0 = arith.constant 0 : i32
    %c0_i32_1 = arith.constant 0 : i32
    return %c0_i32, %c0_i32_0 : i32, i32
  }
  func.func @transform_7(%arg0: i32) -> (i32, i32, i32) {
    %c0_i32 = arith.constant 0 : i32
    %c0_i32_0 = arith.constant 0 : i32
    %c0_i32_1 = arith.constant 0 : i32
    return %arg0, %c0_i32, %c0_i32_0 : i32, i32, i32
  }
}

</mosaic_0001>

<llo_original>
// kernel: tpu_custom_call.1
$region0: #{tpu_custom_call.1}
  #allocation0 [shape = 'u32[]', space=smem, size = 0x4, offset = 0x4, fixed_abs, tag = 'smem constant byte address 0x4 - core index']
  #allocation1 [shape = 'u32[72,128]{1,0:T(1,128)}', space=vmem, size = 0x9000, scoped, tag = 'internal scratch']
  #allocation2 [shape = 'f32[1,1]{1,0:T(1,128)S(1)}', space=vmem, size = 0x200, scoped, tag = 'scoped memory for tpu_custom_call.1']
  %s0 = inlined_call_operand.vmem [shape: f32[8,4,64], index: 0, kind: input, shape index: {}]
  %s1 = inlined_call_operand.hbm [shape: f32[8,16,32], index: 1, kind: input, shape index: {}]
  %s2 = inlined_call_operand.vmem [shape: f32[16,1], index: 2, kind: input, shape index: {}]
  %s3 = inlined_call_operand.hbm [shape: f32[32,32], index: 3, kind: input, shape index: {}]
  %s4 = inlined_call_operand.vmem [shape: f32[32,1], index: 4, kind: input, shape index: {}]
  %s5 = inlined_call_operand.vmem [shape: f32[1,32], index: 5, kind: input, shape index: {}]
  %s6 = inlined_call_operand.<no memory space> [shape: f32[1,1], index: 6, kind: input, shape index: {}]
  %s7 = inlined_call_operand.hbm [shape: f32[1,1,8], index: 7, kind: output, shape index: {}]
  %s8 = sld [smem:[#allocation0]]
  $region46: #{tpu_custom_call.1} parent=0
    _
  %s10 = ssub.s32 1, %s8
  %s11 = scalar_select 0, %s10, %s8
  %v12 = vstv %s6
  %13 = vst [vmem:[#allocation2] sm:$0x1] %v12
  $region1: #{tpu_custom_call.1} parent=0
    #allocation3 [shape = 'u8[65536]{0}', space=vmem, size = 0x10000, scoped, tag = 'input window, operand 1, single buffered']
    #allocation4 [shape = 's32[1]{0}', space=sflag, size = 0x4, scoped, tag = 'scoped memory for tpu_custom_call.1']
    #allocation5 [shape = 's32[1]{0}', space=sflag, size = 0x4, scoped, tag = 'scoped memory for tpu_custom_call.1']
    #allocation6 [shape = 'u8[16384]{0}', space=vmem, size = 0x4000, scoped, tag = 'input window, operand 3, single buffered']
    #allocation7 [shape = 's32[1]{0}', space=sflag, size = 0x4, scoped, tag = 'scoped memory for tpu_custom_call.1']
    #allocation8 [shape = 'u8[512]{0}', space=vmem, size = 0x400, scoped, tag = 'output window, operand 0, single buffered']
    %14 = vsyncpa [#allocation4], 0
    %15 = vsyncpa [#allocation7], 0
    %16 = vsyncpa [#allocation5], 0
    // Predicated region
    $region2: #{tpu_custom_call.1} parent=1 // pred_check
      _
    $region3: #{tpu_custom_call.1} parent=1 // pred_check_branch
      %18 = sbr.rel (0) target = $region5
    $region4: #{tpu_custom_call.1} parent=1 // pred_region
      _
    $region5: #{tpu_custom_call.1} parent=1 // pred_fallthru
      _
    // Predicated region
    $region6: #{tpu_custom_call.1} parent=1 // pred_check
      _
    $region7: #{tpu_custom_call.1} parent=1 // pred_check_branch
      %20 = sbr.rel (0) target = $region9
    $region8: #{tpu_custom_call.1} parent=1 // pred_region
      %22 = vsyncadd [#allocation4], 0
      %s23 = sshll.u32 %s1, 4
      %s24 = int_to_ptr.hbm [resolvable:$true] %s23
      %s25 = sshll.u32 [#allocation3], 4
      %s26 = int_to_ptr.vmem [resolvable:$true] %s25
      %31 = dma.hbm_to_vmem [thread:$0]  %s24, 2048, %s26, [#allocation4], 128, 128, 8
    $region9: #{tpu_custom_call.1} parent=1 // pred_fallthru
      _
    // Predicated region
    $region10: #{tpu_custom_call.1} parent=1 // pred_check
      _
    $region11: #{tpu_custom_call.1} parent=1 // pred_check_branch
      %33 = sbr.rel (0) target = $region13
    $region12: #{tpu_custom_call.1} parent=1 // pred_region
      _
    $region13: #{tpu_custom_call.1} parent=1 // pred_fallthru
      _
    // Predicated region
    $region14: #{tpu_custom_call.1} parent=1 // pred_check
      _
    $region15: #{tpu_custom_call.1} parent=1 // pred_check_branch
      %35 = sbr.rel (0) target = $region17
    $region16: #{tpu_custom_call.1} parent=1 // pred_region
      %37 = vsyncadd [#allocation7], 0
      %s38 = sshll.u32 %s3, 4
      %s39 = int_to_ptr.hbm [resolvable:$true] %s38
      %s40 = sshll.u32 [#allocation6], 4
      %s41 = int_to_ptr.vmem [resolvable:$true] %s40
      %46 = dma.hbm_to_vmem [thread:$0]  %s39, 512, %s41, [#allocation7], 128, 128, 8
    $region17: #{tpu_custom_call.1} parent=1 // pred_fallthru
      _
    // Predicated region
    $region18: #{tpu_custom_call.1} parent=1 // pred_check
      _
    $region19: #{tpu_custom_call.1} parent=1 // pred_check_branch
      %48 = sbr.rel (0) target = $region21
    $region20: #{tpu_custom_call.1} parent=1 // pred_region
      _
    $region21: #{tpu_custom_call.1} parent=1 // pred_fallthru
      _
    // Predicated region
    $region22: #{tpu_custom_call.1} parent=1 // pred_check
      _
    $region23: #{tpu_custom_call.1} parent=1 // pred_check_branch
      %50 = sbr.rel (0) target = $region25
    $region24: #{tpu_custom_call.1} parent=1 // pred_region
      _
    $region25: #{tpu_custom_call.1} parent=1 // pred_fallthru
      _
    // Predicated region
    $region26: #{tpu_custom_call.1} parent=1 // pred_check
      _
    $region27: #{tpu_custom_call.1} parent=1 // pred_check_branch
      %52 = sbr.rel (0) target = $region29
    $region28: #{tpu_custom_call.1} parent=1 // pred_region
      _
    $region29: #{tpu_custom_call.1} parent=1 // pred_fallthru
      _
    // Predicated region
    $region30: #{tpu_custom_call.1} parent=1 // pred_check
      _
    $region31: #{tpu_custom_call.1} parent=1 // pred_check_branch
      %54 = sbr.rel (0) target = $region33
    $region32: #{tpu_custom_call.1} parent=1 // pred_region
      %56 = dma.done [#allocation4], 2048
    $region33: #{tpu_custom_call.1} parent=1 // pred_fallthru
      _
    // Predicated region
    $region34: #{tpu_custom_call.1} parent=1 // pred_check
      _
    $region35: #{tpu_custom_call.1} parent=1 // pred_check_branch
      %58 = sbr.rel (0) target = $region37
    $region36: #{tpu_custom_call.1} parent=1 // pred_region
      %60 = dma.done [#allocation7], 512
    $region37: #{tpu_custom_call.1} parent=1 // pred_fallthru
      _
    %v61 = vld [vmem:[%s0] sm:$0xf]
    %v62 = vld [vmem:[%s0 + $0x4] sm:$0xf]
    %v63 = vld [vmem:[%s0 + $0x8] sm:$0xf]
    %v64 = vld [vmem:[%s0 + $0xc] sm:$0xf]
    %v65 = vld [vmem:[%s0 + $0x10] sm:$0xf]
    %v66 = vld [vmem:[%s0 + $0x14] sm:$0xf]
    %v67 = vld [vmem:[%s0 + $0x18] sm:$0xf]
    %v68 = vld [vmem:[%s0 + $0x1c] sm:$0xf]
    %v77 = vrot.slane %v61, 4
    %v78 = vrot.slane %v62, 4
    %v79 = vrot.slane %v63, 4
    %v80 = vrot.slane %v64, 4
    %v81 = vrot.slane %v65, 4
    %v82 = vrot.slane %v66, 4
    %v83 = vrot.slane %v67, 4
    %v84 = vrot.slane %v68, 4
    %85 = vrot.lane.b32.xlu0 %v77, 127
    %v86 = vpop.permute.xlu0 %85
    %87 = vrot.lane.b32.xlu0 %v78, 127
    %v88 = vpop.permute.xlu0 %87
    %89 = vrot.lane.b32.xlu0 %v79, 127
    %v90 = vpop.permute.xlu0 %89
    %91 = vrot.lane.b32.xlu0 %v80, 127
    %v92 = vpop.permute.xlu0 %91
    %93 = vrot.lane.b32.xlu0 %v81, 127
    %v94 = vpop.permute.xlu0 %93
    %95 = vrot.lane.b32.xlu0 %v82, 127
    %v96 = vpop.permute.xlu0 %95
    %97 = vrot.lane.b32.xlu0 %v83, 127
    %v98 = vpop.permute.xlu0 %97
    %99 = vrot.lane.b32.xlu0 %v84, 127
    %v100 = vpop.permute.xlu0 %99
    %109 = vrot.lane.b32.xlu0 %v61, 126
    %v110 = vpop.permute.xlu0 %109
    %111 = vrot.lane.b32.xlu0 %v62, 126
    %v112 = vpop.permute.xlu0 %111
    %113 = vrot.lane.b32.xlu0 %v63, 126
    %v114 = vpop.permute.xlu0 %113
    %115 = vrot.lane.b32.xlu0 %v64, 126
    %v116 = vpop.permute.xlu0 %115
    %117 = vrot.lane.b32.xlu0 %v65, 126
    %v118 = vpop.permute.xlu0 %117
    %119 = vrot.lane.b32.xlu0 %v66, 126
    %v120 = vpop.permute.xlu0 %119
    %121 = vrot.lane.b32.xlu0 %v67, 126
    %v122 = vpop.permute.xlu0 %121
    %123 = vrot.lane.b32.xlu0 %v68, 126
    %v124 = vpop.permute.xlu0 %123
    %133 = vrot.lane.b32.xlu0 %v77, 125
    %v134 = vpop.permute.xlu0 %133
    %135 = vrot.lane.b32.xlu0 %v78, 125
    %v136 = vpop.permute.xlu0 %135
    %137 = vrot.lane.b32.xlu0 %v79, 125
    %v138 = vpop.permute.xlu0 %137
    %139 = vrot.lane.b32.xlu0 %v80, 125
    %v140 = vpop.permute.xlu0 %139
    %141 = vrot.lane.b32.xlu0 %v81, 125
    %v142 = vpop.permute.xlu0 %141
    %143 = vrot.lane.b32.xlu0 %v82, 125
    %v144 = vpop.permute.xlu0 %143
    %145 = vrot.lane.b32.xlu0 %v83, 125
    %v146 = vpop.permute.xlu0 %145
    %147 = vrot.lane.b32.xlu0 %v84, 125
    %v148 = vpop.permute.xlu0 %147
    %157 = vrot.lane.b32.xlu0 %v61, 124
    %v158 = vpop.permute.xlu0 %157
    %159 = vrot.lane.b32.xlu0 %v62, 124
    %v160 = vpop.permute.xlu0 %159
    %161 = vrot.lane.b32.xlu0 %v63, 124
    %v162 = vpop.permute.xlu0 %161
    %163 = vrot.lane.b32.xlu0 %v64, 124
    %v164 = vpop.permute.xlu0 %163
    %165 = vrot.lane.b32.xlu0 %v65, 124
    %v166 = vpop.permute.xlu0 %165
    %167 = vrot.lane.b32.xlu0 %v66, 124
    %v168 = vpop.permute.xlu0 %167
    %169 = vrot.lane.b32.xlu0 %v67, 124
    %v170 = vpop.permute.xlu0 %169
    %171 = vrot.lane.b32.xlu0 %v68, 124
    %v172 = vpop.permute.xlu0 %171
    %181 = vrot.lane.b32.xlu0 %v77, 123
    %v182 = vpop.permute.xlu0 %181
    %183 = vrot.lane.b32.xlu0 %v78, 123
    %v184 = vpop.permute.xlu0 %183
    %185 = vrot.lane.b32.xlu0 %v79, 123
    %v186 = vpop.permute.xlu0 %185
    %187 = vrot.lane.b32.xlu0 %v80, 123
    %v188 = vpop.permute.xlu0 %187
    %189 = vrot.lane.b32.xlu0 %v81, 123
    %v190 = vpop.permute.xlu0 %189
    %191 = vrot.lane.b32.xlu0 %v82, 123
    %v192 = vpop.permute.xlu0 %191
    %193 = vrot.lane.b32.xlu0 %v83, 123
    %v194 = vpop.permute.xlu0 %193
    %195 = vrot.lane.b32.xlu0 %v84, 123
    %v196 = vpop.permute.xlu0 %195
    %205 = vrot.lane.b32.xlu0 %v61, 122
    %v206 = vpop.permute.xlu0 %205
    %207 = vrot.lane.b32.xlu0 %v62, 122
    %v208 = vpop.permute.xlu0 %207
    %209 = vrot.lane.b32.xlu0 %v63, 122
    %v210 = vpop.permute.xlu0 %209
    %211 = vrot.lane.b32.xlu0 %v64, 122
    %v212 = vpop.permute.xlu0 %211
    %213 = vrot.lane.b32.xlu0 %v65, 122
    %v214 = vpop.permute.xlu0 %213
    %215 = vrot.lane.b32.xlu0 %v66, 122
    %v216 = vpop.permute.xlu0 %215
    %217 = vrot.lane.b32.xlu0 %v67, 122
    %v218 = vpop.permute.xlu0 %217
    %219 = vrot.lane.b32.xlu0 %v68, 122
    %v220 = vpop.permute.xlu0 %219
    %229 = vrot.lane.b32.xlu0 %v77, 121
    %v230 = vpop.permute.xlu0 %229
    %231 = vrot.lane.b32.xlu0 %v78, 121
    %v232 = vpop.permute.xlu0 %231
    %233 = vrot.lane.b32.xlu0 %v79, 121
    %v234 = vpop.permute.xlu0 %233
    %235 = vrot.lane.b32.xlu0 %v80, 121
    %v236 = vpop.permute.xlu0 %235
    %237 = vrot.lane.b32.xlu0 %v81, 121
    %v238 = vpop.permute.xlu0 %237
    %239 = vrot.lane.b32.xlu0 %v82, 121
    %v240 = vpop.permute.xlu0 %239
    %241 = vrot.lane.b32.xlu0 %v83, 121
    %v242 = vpop.permute.xlu0 %241
    %243 = vrot.lane.b32.xlu0 %v84, 121
    %v244 = vpop.permute.xlu0 %243
    %vm253 = vcmask 1043456
    %v254 = vsel %vm253, %v61, %v86
    %v255 = vsel %vm253, %v62, %v88
    %v256 = vsel %vm253, %v63, %v90
    %v257 = vsel %vm253, %v64, %v92
    %v258 = vsel %vm253, %v65, %v94
    %v259 = vsel %vm253, %v66, %v96
    %v260 = vsel %vm253, %v67, %v98
    %v261 = vsel %vm253, %v68, %v100
    %v262 = vsel %vm253, %v110, %v134
    %v263 = vsel %vm253, %v112, %v136
    %v264 = vsel %vm253, %v114, %v138
    %v265 = vsel %vm253, %v116, %v140
    %v266 = vsel %vm253, %v118, %v142
    %v267 = vsel %vm253, %v120, %v144
    %v268 = vsel %vm253, %v122, %v146
    %v269 = vsel %vm253, %v124, %v148
    %v270 = vsel %vm253, %v158, %v182
    %v271 = vsel %vm253, %v160, %v184
    %v272 = vsel %vm253, %v162, %v186
    %v273 = vsel %vm253, %v164, %v188
    %v274 = vsel %vm253, %v166, %v190
    %v275 = vsel %vm253, %v168, %v192
    %v276 = vsel %vm253, %v170, %v194
    %v277 = vsel %vm253, %v172, %v196
    %v278 = vsel %vm253, %v206, %v230
    %v279 = vsel %vm253, %v208, %v232
    %v280 = vsel %vm253, %v210, %v234
    %v281 = vsel %vm253, %v212, %v236
    %v282 = vsel %vm253, %v214, %v238
    %v283 = vsel %vm253, %v216, %v240
    %v284 = vsel %vm253, %v218, %v242
    %v285 = vsel %vm253, %v220, %v244
    %v286 = vld [vmem:[#allocation3] sm:$0xff]
    %v287 = vld [vmem:[#allocation3 + $0x8] sm:$0xff]
    %v288 = vld [vmem:[#allocation3 + $0x10] sm:$0xff]
    %v289 = vld [vmem:[#allocation3 + $0x18] sm:$0xff]
    %v290 = vld [vmem:[#allocation3 + $0x20] sm:$0xff]
    %v291 = vld [vmem:[#allocation3 + $0x28] sm:$0xff]
    %v292 = vld [vmem:[#allocation3 + $0x30] sm:$0xff]
    %v293 = vld [vmem:[#allocation3 + $0x38] sm:$0xff]
    %v294 = vld [vmem:[#allocation3 + $0x40] sm:$0xff]
    %v295 = vld [vmem:[#allocation3 + $0x48] sm:$0xff]
    %v296 = vld [vmem:[#allocation3 + $0x50] sm:$0xff]
    %v297 = vld [vmem:[#allocation3 + $0x58] sm:$0xff]
    %v298 = vld [vmem:[#allocation3 + $0x60] sm:$0xff]
    %v299 = vld [vmem:[#allocation3 + $0x68] sm:$0xff]
    %v300 = vld [vmem:[#allocation3 + $0x70] sm:$0xff]
    %v301 = vld [vmem:[#allocation3 + $0x78] sm:$0xff]
    %v302 = vld [vmem:[%s2] sm:$0xff]
    %v303 = vld [vmem:[%s2 + $0x8] sm:$0xff]
    %305 = vset.pattern.permute.xlu0 0
    %306 = vperm.xlu0 %305, %v302
    %v307 = vpop.permute.xlu0 %306
    %310 = vset.pattern.permute.xlu0 0
    %311 = vperm.xlu0 %310, %v303
    %v312 = vpop.permute.xlu0 %311
    %vm314 = vcmask 261120
    %v316 = vsel %vm314, %v286, 0
    %v319 = vsel %vm314, %v287, 0
    %321 = vmatpush.msra.mxu0 0.0
    %322 = vmatpush.msra.mxu0 0.0
    %323 = vmatpush.msra.mxu0 0.0
    %324 = vmatpush.msra.mxu0 0.0
    %325 = vmatpush.msra.mxu0 0.0
    %326 = vmatpush.msra.mxu0 0.0
    %327 = vmatpush.msra.mxu0 0.0
    %328 = vmatpush.msra.mxu0 0.0
    %329 = vmatpush.msra.mxu0 0.0
    %330 = vmatpush.msra.mxu0 0.0
    %331 = vmatpush.msra.mxu0 0.0
    %332 = vmatpush.msra.mxu0 0.0
    %333 = vmatpush.msra.mxu0 %v278
    %334 = vmatpush.msra.mxu0 %v270
    %335 = vmatpush.msra.mxu0 %v262
    %336 = vmatpush.msra.mxu0 %v254
    %337 = vmatmul.f32.gmra.mxu0 %v316
    %v338 = vpop.f32.mrf.mxu0
    %v339 = vadd.f32 %v307, %v338
    %340 = vmatmul.f32.gmra.mxu0 %v319
    %v341 = vpop.f32.mrf.mxu0
    %v342 = vadd.f32 %v312, %v341
    %343 = vdwg.mxu0
    %v345 = vsel %vm314, %v288, 0
    %v348 = vsel %vm314, %v289, 0
    %350 = vmatpush.msra.mxu0 0.0
    %351 = vmatpush.msra.mxu0 0.0
    %352 = vmatpush.msra.mxu0 0.0
    %353 = vmatpush.msra.mxu0 0.0
    %354 = vmatpush.msra.mxu0 0.0
    %355 = vmatpush.msra.mxu0 0.0
    %356 = vmatpush.msra.mxu0 0.0
    %357 = vmatpush.msra.mxu0 0.0
    %358 = vmatpush.msra.mxu0 0.0
    %359 = vmatpush.msra.mxu0 0.0
    %360 = vmatpush.msra.mxu0 0.0
    %361 = vmatpush.msra.mxu0 0.0
    %362 = vmatpush.msra.mxu0 %v279
    %363 = vmatpush.msra.mxu0 %v271
    %364 = vmatpush.msra.mxu0 %v263
    %365 = vmatpush.msra.mxu0 %v255
    %366 = vmatmul.f32.gmra.mxu0 %v345
    %v367 = vpop.f32.mrf.mxu0
    %v368 = vadd.f32 %v307, %v367
    %369 = vmatmul.f32.gmra.mxu0 %v348
    %v370 = vpop.f32.mrf.mxu0
    %v371 = vadd.f32 %v312, %v370
    %372 = vdwg.mxu0
    %v374 = vsel %vm314, %v290, 0
    %v377 = vsel %vm314, %v291, 0
    %379 = vmatpush.msra.mxu0 0.0
    %380 = vmatpush.msra.mxu0 0.0
    %381 = vmatpush.msra.mxu0 0.0
    %382 = vmatpush.msra.mxu0 0.0
    %383 = vmatpush.msra.mxu0 0.0
    %384 = vmatpush.msra.mxu0 0.0
    %385 = vmatpush.msra.mxu0 0.0
    %386 = vmatpush.msra.mxu0 0.0
    %387 = vmatpush.msra.mxu0 0.0
    %388 = vmatpush.msra.mxu0 0.0
    %389 = vmatpush.msra.mxu0 0.0
    %390 = vmatpush.msra.mxu0 0.0
    %391 = vmatpush.msra.mxu0 %v280
    %392 = vmatpush.msra.mxu0 %v272
    %393 = vmatpush.msra.mxu0 %v264
    %394 = vmatpush.msra.mxu0 %v256
    %395 = vmatmul.f32.gmra.mxu0 %v374
    %v396 = vpop.f32.mrf.mxu0
    %v397 = vadd.f32 %v307, %v396
    %398 = vmatmul.f32.gmra.mxu0 %v377
    %v399 = vpop.f32.mrf.mxu0
    %v400 = vadd.f32 %v312, %v399
    %401 = vdwg.mxu0
    %v403 = vsel %vm314, %v292, 0
    %v406 = vsel %vm314, %v293, 0
    %408 = vmatpush.msra.mxu0 0.0
    %409 = vmatpush.msra.mxu0 0.0
    %410 = vmatpush.msra.mxu0 0.0
    %411 = vmatpush.msra.mxu0 0.0
    %412 = vmatpush.msra.mxu0 0.0
    %413 = vmatpush.msra.mxu0 0.0
    %414 = vmatpush.msra.mxu0 0.0
    %415 = vmatpush.msra.mxu0 0.0
    %416 = vmatpush.msra.mxu0 0.0
    %417 = vmatpush.msra.mxu0 0.0
    %418 = vmatpush.msra.mxu0 0.0
    %419 = vmatpush.msra.mxu0 0.0
    %420 = vmatpush.msra.mxu0 %v281
    %421 = vmatpush.msra.mxu0 %v273
    %422 = vmatpush.msra.mxu0 %v265
    %423 = vmatpush.msra.mxu0 %v257
    %424 = vmatmul.f32.gmra.mxu0 %v403
    %v425 = vpop.f32.mrf.mxu0
    %v426 = vadd.f32 %v307, %v425
    %427 = vmatmul.f32.gmra.mxu0 %v406
    %v428 = vpop.f32.mrf.mxu0
    %v429 = vadd.f32 %v312, %v428
    %430 = vdwg.mxu0
    %v432 = vsel %vm314, %v294, 0
    %v435 = vsel %vm314, %v295, 0
    %437 = vmatpush.msra.mxu0 0.0
    %438 = vmatpush.msra.mxu0 0.0
    %439 = vmatpush.msra.mxu0 0.0
    %440 = vmatpush.msra.mxu0 0.0
    %441 = vmatpush.msra.mxu0 0.0
    %442 = vmatpush.msra.mxu0 0.0
    %443 = vmatpush.msra.mxu0 0.0
    %444 = vmatpush.msra.mxu0 0.0
    %445 = vmatpush.msra.mxu0 0.0
    %446 = vmatpush.msra.mxu0 0.0
    %447 = vmatpush.msra.mxu0 0.0
    %448 = vmatpush.msra.mxu0 0.0
    %449 = vmatpush.msra.mxu0 %v282
    %450 = vmatpush.msra.mxu0 %v274
    %451 = vmatpush.msra.mxu0 %v266
    %452 = vmatpush.msra.mxu0 %v258
    %453 = vmatmul.f32.gmra.mxu0 %v432
    %v454 = vpop.f32.mrf.mxu0
    %v455 = vadd.f32 %v307, %v454
    %456 = vmatmul.f32.gmra.mxu0 %v435
    %v457 = vpop.f32.mrf.mxu0
    %v458 = vadd.f32 %v312, %v457
    %459 = vdwg.mxu0
    %v461 = vsel %vm314, %v296, 0
    %v464 = vsel %vm314, %v297, 0
    %466 = vmatpush.msra.mxu0 0.0
    %467 = vmatpush.msra.mxu0 0.0
    %468 = vmatpush.msra.mxu0 0.0
    %469 = vmatpush.msra.mxu0 0.0
    %470 = vmatpush.msra.mxu0 0.0
    %471 = vmatpush.msra.mxu0 0.0
    %472 = vmatpush.msra.mxu0 0.0
    %473 = vmatpush.msra.mxu0 0.0
    %474 = vmatpush.msra.mxu0 0.0
    %475 = vmatpush.msra.mxu0 0.0
    %476 = vmatpush.msra.mxu0 0.0
    %477 = vmatpush.msra.mxu0 0.0
    %478 = vmatpush.msra.mxu0 %v283
    %479 = vmatpush.msra.mxu0 %v275
    %480 = vmatpush.msra.mxu0 %v267
    %481 = vmatpush.msra.mxu0 %v259
    %482 = vmatmul.f32.gmra.mxu0 %v461
    %v483 = vpop.f32.mrf.mxu0
    %v484 = vadd.f32 %v307, %v483
    %485 = vmatmul.f32.gmra.mxu0 %v464
    %v486 = vpop.f32.mrf.mxu0
    %v487 = vadd.f32 %v312, %v486
    %488 = vdwg.mxu0
    %v490 = vsel %vm314, %v298, 0
    %v493 = vsel %vm314, %v299, 0
    %495 = vmatpush.msra.mxu0 0.0
    %496 = vmatpush.msra.mxu0 0.0
    %497 = vmatpush.msra.mxu0 0.0
    %498 = vmatpush.msra.mxu0 0.0
    %499 = vmatpush.msra.mxu0 0.0
    %500 = vmatpush.msra.mxu0 0.0
    %501 = vmatpush.msra.mxu0 0.0
    %502 = vmatpush.msra.mxu0 0.0
    %503 = vmatpush.msra.mxu0 0.0
    %504 = vmatpush.msra.mxu0 0.0
    %505 = vmatpush.msra.mxu0 0.0
    %506 = vmatpush.msra.mxu0 0.0
    %507 = vmatpush.msra.mxu0 %v284
    %508 = vmatpush.msra.mxu0 %v276
    %509 = vmatpush.msra.mxu0 %v268
    %510 = vmatpush.msra.mxu0 %v260
    %511 = vmatmul.f32.gmra.mxu0 %v490
    %v512 = vpop.f32.mrf.mxu0
    %v513 = vadd.f32 %v307, %v512
    %514 = vmatmul.f32.gmra.mxu0 %v493
    %v515 = vpop.f32.mrf.mxu0
    %v516 = vadd.f32 %v312, %v515
    %517 = vdwg.mxu0
    %v519 = vsel %vm314, %v300, 0
    %v522 = vsel %vm314, %v301, 0
    %524 = vmatpush.msra.mxu0 0.0
    %525 = vmatpush.msra.mxu0 0.0
    %526 = vmatpush.msra.mxu0 0.0
    %527 = vmatpush.msra.mxu0 0.0
    %528 = vmatpush.msra.mxu0 0.0
    %529 = vmatpush.msra.mxu0 0.0
    %530 = vmatpush.msra.mxu0 0.0
    %531 = vmatpush.msra.mxu0 0.0
    %532 = vmatpush.msra.mxu0 0.0
    %533 = vmatpush.msra.mxu0 0.0
    %534 = vmatpush.msra.mxu0 0.0
    %535 = vmatpush.msra.mxu0 0.0
    %536 = vmatpush.msra.mxu0 %v285
    %537 = vmatpush.msra.mxu0 %v277
    %538 = vmatpush.msra.mxu0 %v269
    %539 = vmatpush.msra.mxu0 %v261
    %540 = vmatmul.f32.gmra.mxu0 %v519
    %v541 = vpop.f32.mrf.mxu0
    %v542 = vadd.f32 %v307, %v541
    %543 = vmatmul.f32.gmra.mxu0 %v522
    %v544 = vpop.f32.mrf.mxu0
    %v545 = vadd.f32 %v312, %v544
    %546 = vdwg.mxu0
    %v547 = vmax.f32 %v339, 0.0
    %v548 = vmax.f32 %v342, 0.0
    %v549 = vmax.f32 %v368, 0.0
    %v550 = vmax.f32 %v371, 0.0
    %v551 = vmax.f32 %v397, 0.0
    %v552 = vmax.f32 %v400, 0.0
    %v553 = vmax.f32 %v426, 0.0
    %v554 = vmax.f32 %v429, 0.0
    %v555 = vmax.f32 %v455, 0.0
    %v556 = vmax.f32 %v458, 0.0
    %v557 = vmax.f32 %v484, 0.0
    %v558 = vmax.f32 %v487, 0.0
    %v559 = vmax.f32 %v513, 0.0
    %v560 = vmax.f32 %v516, 0.0
    %v561 = vmax.f32 %v542, 0.0
    %v562 = vmax.f32 %v545, 0.0
    %vm563 = vcmask 465920
    %v564 = vsel %vm563, %v547, -inf
    %565 = vmax.xlane.f32.xlu0 %v564
    %v566 = vpop.xlane.xlu0 %565
    %v567 = vsel %vm563, %v548, -inf
    %568 = vmax.xlane.f32.xlu0 %v567
    %v569 = vpop.xlane.xlu0 %568
    %v570 = vsel %vm563, %v549, -inf
    %571 = vmax.xlane.f32.xlu0 %v570
    %v572 = vpop.xlane.xlu0 %571
    %v573 = vsel %vm563, %v550, -inf
    %574 = vmax.xlane.f32.xlu0 %v573
    %v575 = vpop.xlane.xlu0 %574
    %v576 = vsel %vm563, %v551, -inf
    %577 = vmax.xlane.f32.xlu0 %v576
    %v578 = vpop.xlane.xlu0 %577
    %v579 = vsel %vm563, %v552, -inf
    %580 = vmax.xlane.f32.xlu0 %v579
    %v581 = vpop.xlane.xlu0 %580
    %v582 = vsel %vm563, %v553, -inf
    %583 = vmax.xlane.f32.xlu0 %v582
    %v584 = vpop.xlane.xlu0 %583
    %v585 = vsel %vm563, %v554, -inf
    %586 = vmax.xlane.f32.xlu0 %v585
    %v587 = vpop.xlane.xlu0 %586
    %v588 = vsel %vm563, %v555, -inf
    %589 = vmax.xlane.f32.xlu0 %v588
    %v590 = vpop.xlane.xlu0 %589
    %v591 = vsel %vm563, %v556, -inf
    %592 = vmax.xlane.f32.xlu0 %v591
    %v593 = vpop.xlane.xlu0 %592
    %v594 = vsel %vm563, %v557, -inf
    %595 = vmax.xlane.f32.xlu0 %v594
    %v596 = vpop.xlane.xlu0 %595
    %v597 = vsel %vm563, %v558, -inf
    %598 = vmax.xlane.f32.xlu0 %v597
    %v599 = vpop.xlane.xlu0 %598
    %v600 = vsel %vm563, %v559, -inf
    %601 = vmax.xlane.f32.xlu0 %v600
    %v602 = vpop.xlane.xlu0 %601
    %v603 = vsel %vm563, %v560, -inf
    %604 = vmax.xlane.f32.xlu0 %v603
    %v605 = vpop.xlane.xlu0 %604
    %v606 = vsel %vm563, %v561, -inf
    %607 = vmax.xlane.f32.xlu0 %v606
    %v608 = vpop.xlane.xlu0 %607
    %v609 = vsel %vm563, %v562, -inf
    %610 = vmax.xlane.f32.xlu0 %v609
    %v611 = vpop.xlane.xlu0 %610
    %v612 = vsel %vm563, %v547, 0.0
    %613 = vadd.xlane.f32.xlu0 %v612
    %v614 = vpop.xlane.xlu0 %613
    %v615 = vsel %vm563, %v548, 0.0
    %616 = vadd.xlane.f32.xlu0 %v615
    %v617 = vpop.xlane.xlu0 %616
    %v618 = vsel %vm563, %v549, 0.0
    %619 = vadd.xlane.f32.xlu0 %v618
    %v620 = vpop.xlane.xlu0 %619
    %v621 = vsel %vm563, %v550, 0.0
    %622 = vadd.xlane.f32.xlu0 %v621
    %v623 = vpop.xlane.xlu0 %622
    %v624 = vsel %vm563, %v551, 0.0
    %625 = vadd.xlane.f32.xlu0 %v624
    %v626 = vpop.xlane.xlu0 %625
    %v627 = vsel %vm563, %v552, 0.0
    %628 = vadd.xlane.f32.xlu0 %v627
    %v629 = vpop.xlane.xlu0 %628
    %v630 = vsel %vm563, %v553, 0.0
    %631 = vadd.xlane.f32.xlu0 %v630
    %v632 = vpop.xlane.xlu0 %631
    %v633 = vsel %vm563, %v554, 0.0
    %634 = vadd.xlane.f32.xlu0 %v633
    %v635 = vpop.xlane.xlu0 %634
    %v636 = vsel %vm563, %v555, 0.0
    %637 = vadd.xlane.f32.xlu0 %v636
    %v638 = vpop.xlane.xlu0 %637
    %v639 = vsel %vm563, %v556, 0.0
    %640 = vadd.xlane.f32.xlu0 %v639
    %v641 = vpop.xlane.xlu0 %640
    %v642 = vsel %vm563, %v557, 0.0
    %643 = vadd.xlane.f32.xlu0 %v642
    %v644 = vpop.xlane.xlu0 %643
    %v645 = vsel %vm563, %v558, 0.0
    %646 = vadd.xlane.f32.xlu0 %v645
    %v647 = vpop.xlane.xlu0 %646
    %v648 = vsel %vm563, %v559, 0.0
    %649 = vadd.xlane.f32.xlu0 %v648
    %v650 = vpop.xlane.xlu0 %649
    %v651 = vsel %vm563, %v560, 0.0
    %652 = vadd.xlane.f32.xlu0 %v651
    %v653 = vpop.xlane.xlu0 %652
    %v654 = vsel %vm563, %v561, 0.0
    %655 = vadd.xlane.f32.xlu0 %v654
    %v656 = vpop.xlane.xlu0 %655
    %v657 = vsel %vm563, %v562, 0.0
    %658 = vadd.xlane.f32.xlu0 %v657
    %v659 = vpop.xlane.xlu0 %658
    %v660 = vmul.f32 %v614, 0.01754386
    %v661 = vmul.f32 %v617, 0.01754386
    %v662 = vmul.f32 %v620, 0.01754386
    %v663 = vmul.f32 %v623, 0.01754386
    %v664 = vmul.f32 %v626, 0.01754386
    %v665 = vmul.f32 %v629, 0.01754386
    %v666 = vmul.f32 %v632, 0.01754386
    %v667 = vmul.f32 %v635, 0.01754386
    %v668 = vmul.f32 %v638, 0.01754386
    %v669 = vmul.f32 %v641, 0.01754386
    %v670 = vmul.f32 %v644, 0.01754386
    %v671 = vmul.f32 %v647, 0.01754386
    %v672 = vmul.f32 %v650, 0.01754386
    %v673 = vmul.f32 %v653, 0.01754386
    %v674 = vmul.f32 %v656, 0.01754386
    %v675 = vmul.f32 %v659, 0.01754386
    %v692 = vlaneseq
    %v693 = vand.u32 %v692, 127
    %v694 = vperm.slane %v566, %v693
    %v695 = vadd.s32 %v693, 4294967288
    %v696 = vperm.slane %v569, %v695
    %vm697 = vcmask 130112
    %v698 = vsel %vm697, %v696, %v694
    %v699 = vperm.slane %v572, %v693
    %v700 = vperm.slane %v575, %v695
    %v701 = vsel %vm697, %v700, %v699
    %v702 = vperm.slane %v578, %v693
    %v703 = vperm.slane %v581, %v695
    %v704 = vsel %vm697, %v703, %v702
    %v705 = vperm.slane %v584, %v693
    %v706 = vperm.slane %v587, %v695
    %v707 = vsel %vm697, %v706, %v705
    %v708 = vperm.slane %v590, %v693
    %v709 = vperm.slane %v593, %v695
    %v710 = vsel %vm697, %v709, %v708
    %v711 = vperm.slane %v596, %v693
    %v712 = vperm.slane %v599, %v695
    %v713 = vsel %vm697, %v712, %v711
    %v714 = vperm.slane %v602, %v693
    %v715 = vperm.slane %v605, %v695
    %v716 = vsel %vm697, %v715, %v714
    %v717 = vperm.slane %v608, %v693
    %v718 = vperm.slane %v611, %v695
    %v719 = vsel %vm697, %v718, %v717
    %vm720 = vcmask 1041409
    %v721 = vsel %vm720, %v701, %v698
    %vm722 = vcmask 1042434
    %v723 = vsel %vm722, %v704, %v721
    %vm724 = vcmask 1043459
    %v725 = vsel %vm724, %v707, %v723
    %vm726 = vcmask 1044484
    %v727 = vsel %vm726, %v710, %v725
    %vm728 = vcmask 1045509
    %v729 = vsel %vm728, %v713, %v727
    %vm730 = vcmask 1046534
    %v731 = vsel %vm730, %v716, %v729
    %vm732 = vcmask 1047559
    %v733 = vsel %vm732, %v719, %v731
    %v751 = vadd.s32 %v693, 4294967280
    %v752 = vperm.slane %v660, %v751
    %v753 = vadd.s32 %v693, 4294967272
    %v754 = vperm.slane %v661, %v753
    %vm755 = vcmask 261312
    %v756 = vsel %vm755, %v754, %v752
    %v757 = vperm.slane %v662, %v751
    %v758 = vperm.slane %v663, %v753
    %v759 = vsel %vm755, %v758, %v757
    %v760 = vperm.slane %v664, %v751
    %v761 = vperm.slane %v665, %v753
    %v762 = vsel %vm755, %v761, %v760
    %v763 = vperm.slane %v666, %v751
    %v764 = vperm.slane %v667, %v753
    %v765 = vsel %vm755, %v764, %v763
    %v766 = vperm.slane %v668, %v751
    %v767 = vperm.slane %v669, %v753
    %v768 = vsel %vm755, %v767, %v766
    %v769 = vperm.slane %v670, %v751
    %v770 = vperm.slane %v671, %v753
    %v771 = vsel %vm755, %v770, %v769
    %v772 = vperm.slane %v672, %v751
    %v773 = vperm.slane %v673, %v753
    %v774 = vsel %vm755, %v773, %v772
    %v775 = vperm.slane %v674, %v751
    %v776 = vperm.slane %v675, %v753
    %v777 = vsel %vm755, %v776, %v775
    %v778 = vsel %vm720, %v759, %v756
    %v779 = vsel %vm722, %v762, %v778
    %v780 = vsel %vm724, %v765, %v779
    %v781 = vsel %vm726, %v768, %v780
    %v782 = vsel %vm728, %v771, %v781
    %v783 = vsel %vm730, %v774, %v782
    %v784 = vsel %vm732, %v777, %v783
    %vm786 = vcmask 130048
    %v787 = vsel %vm786, %v733, %v784
    %v788 = vld [vmem:[#allocation6] sm:$0xff]
    %v789 = vld [vmem:[#allocation6 + $0x8] sm:$0xff]
    %v790 = vld [vmem:[#allocation6 + $0x10] sm:$0xff]
    %v791 = vld [vmem:[#allocation6 + $0x18] sm:$0xff]
    %v792 = vld [vmem:[%s4] sm:$0xff]
    %v793 = vld [vmem:[%s4 + $0x8] sm:$0xff]
    %v794 = vld [vmem:[%s4 + $0x10] sm:$0xff]
    %v795 = vld [vmem:[%s4 + $0x18] sm:$0xff]
    %797 = vset.pattern.permute.xlu0 0
    %798 = vperm.xlu0 %797, %v792
    %v799 = vpop.permute.xlu0 %798
    %802 = vset.pattern.permute.xlu0 0
    %803 = vperm.xlu0 %802, %v793
    %v804 = vpop.permute.xlu0 %803
    %807 = vset.pattern.permute.xlu0 0
    %808 = vperm.xlu0 %807, %v794
    %v809 = vpop.permute.xlu0 %808
    %812 = vset.pattern.permute.xlu0 0
    %813 = vperm.xlu0 %812, %v795
    %v814 = vpop.permute.xlu0 %813
    %v817 = vsel %vm314, %v788, 0
    %v820 = vsel %vm314, %v789, 0
    %v823 = vsel %vm314, %v790, 0
    %v826 = vsel %vm314, %v791, 0
    %v829 = vsel %vm314, %v787, 0
    %831 = vmatpush.xpose.msra.mxu0 0.0
    %832 = vmatpush.xpose.msra.mxu0 0.0
    %833 = vmatpush.xpose.msra.mxu0 0.0
    %834 = vmatpush.xpose.msra.mxu0 0.0
    %835 = vmatpush.xpose.msra.mxu0 0.0
    %836 = vmatpush.xpose.msra.mxu0 0.0
    %837 = vmatpush.xpose.msra.mxu0 0.0
    %838 = vmatpush.xpose.msra.mxu0 0.0
    %839 = vmatpush.xpose.msra.mxu0 0.0
    %840 = vmatpush.xpose.msra.mxu0 0.0
    %841 = vmatpush.xpose.msra.mxu0 0.0
    %842 = vmatpush.xpose.msra.mxu0 0.0
    %843 = vmatpush.xpose.msra.mxu0 0.0
    %844 = vmatpush.xpose.msra.mxu0 0.0
    %845 = vmatpush.xpose.msra.mxu0 0.0
    %846 = vmatpush.xpose.msra.mxu0 %v829
    %847 = vmatmul.f32.gmra.mxu0 %v817
    %v848 = vpop.f32.mrf.mxu0
    %v849 = vadd.f32 %v799, %v848
    %850 = vmatmul.f32.gmra.mxu0 %v820
    %v851 = vpop.f32.mrf.mxu0
    %v852 = vadd.f32 %v804, %v851
    %853 = vmatmul.f32.gmra.mxu0 %v823
    %v854 = vpop.f32.mrf.mxu0
    %v855 = vadd.f32 %v809, %v854
    %856 = vmatmul.f32.gmra.mxu0 %v826
    %v857 = vpop.f32.mrf.mxu0
    %v858 = vadd.f32 %v814, %v857
    %859 = vdwg.mxu0
    %v860 = vmax.f32 %v849, 0.0
    %v861 = vmax.f32 %v852, 0.0
    %v862 = vmax.f32 %v855, 0.0
    %v863 = vmax.f32 %v858, 0.0
    %v864 = vld [vmem:[%s5] sm:$0x1]
    %v866 = vsel %vm314, %v864, 0
    %868 = vmatpush.msra.mxu0 0.0
    %869 = vmatpush.msra.mxu0 0.0
    %870 = vmatpush.msra.mxu0 0.0
    %871 = vmatpush.msra.mxu0 0.0
    %872 = vmatpush.msra.mxu0 0.0
    %873 = vmatpush.msra.mxu0 0.0
    %874 = vmatpush.msra.mxu0 0.0
    %875 = vmatpush.msra.mxu0 0.0
    %876 = vmatpush.msra.mxu0 0.0
    %877 = vmatpush.msra.mxu0 0.0
    %878 = vmatpush.msra.mxu0 0.0
    %879 = vmatpush.msra.mxu0 0.0
    %880 = vmatpush.msra.mxu0 %v863
    %881 = vmatpush.msra.mxu0 %v862
    %882 = vmatpush.msra.mxu0 %v861
    %883 = vmatpush.msra.mxu0 %v860
    %884 = vmatmul.f32.gmra.mxu0 %v866
    %v885 = vpop.f32.mrf.mxu0
    %v886 = vadd.f32 0.0, %v885
    %887 = vdwg.mxu0
    %v888 = vmul.f32 %v886, 0.75
    %v889 = vld [vmem:[#allocation2] sm:$0x1]
    %891 = vset.pattern.permute.xlu0 0
    %892 = vperm.xlu0 %891, %v889
    %v893 = vpop.permute.xlu0 %892
    %v895 = vperm.slane %v893, 0
    %v896 = vadd.f32 %v888, %v895
    %vm897 = vcmask 57344
    %898 = vst.msk [vmem:[#allocation8] sm:$0x1] %vm897, %v896
    // Predicated region
    $region38: #{tpu_custom_call.1} parent=1 // pred_check
      _
    $region39: #{tpu_custom_call.1} parent=1 // pred_check_branch
      %900 = sbr.rel (0) target = $region41
    $region40: #{tpu_custom_call.1} parent=1 // pred_region
      %902 = vsyncadd [#allocation5], 0
      %s904 = sshll.u32 [#allocation8], 4
      %s905 = int_to_ptr.vmem [resolvable:$true] %s904
      %s906 = sshll.u32 %s7, 4
      %s907 = int_to_ptr.hbm [resolvable:$true] %s906
      %909 = dma.vmem_to_hbm [thread:$0]  %s905, 16, %s907, [#allocation5]
    $region41: #{tpu_custom_call.1} parent=1 // pred_fallthru
      _
    // Predicated region
    $region42: #{tpu_custom_call.1} parent=1 // pred_check
      _
    $region43: #{tpu_custom_call.1} parent=1 // pred_check_branch
      %911 = sbr.rel (0) target = $region45
    $region44: #{tpu_custom_call.1} parent=1 // pred_region
      %913 = dma.done [#allocation5], 16
    $region45: #{tpu_custom_call.1} parent=1 // pred_fallthru
      _
    %914 = vsyncpa [#allocation4], 1
    %915 = vsyncpa [#allocation7], 1
    %916 = vsyncpa [#allocation5], 1

</llo_original>
